<compile_context>
chip_gen: v7x
topology: tpu7x:2x2x1
jax: 0.10.0
libtpu: 0.0.40
codegen_flags: <defaults>
</compile_context>

<pallas_src>
import math

import jax
import jax.numpy as jnp
from jax.experimental import pallas as pl
from jax.experimental.pallas import tpu as pltpu


_SMALL_BYPASS_BYTES = 512 * 1024   # below this a metadata reshape always wins
_MAX_DMA_CHUNKS = 4                # engage multiple DMA engines on big copies


def _chunk_bounds(lead: int, max_chunks: int = _MAX_DMA_CHUNKS):
    """Static (start, size) chunks along the leading axis, 8-row aligned."""
    n = min(max_chunks, max(1, lead // 8))
    if n <= 1:
        return ((0, lead),)
    base = (lead // n) // 8 * 8
    bounds = []
    start = 0
    for _ in range(n - 1):
        bounds.append((start, base))
        start += base
    bounds.append((start, lead - start))
    return tuple(b for b in bounds if b[1] > 0)


def _make_dma_copy_kernel(chunk_bounds):
    """HBM -> HBM copy: no VMEM staging, DMA engines self-pipeline to the
    HBM roofline with near-zero TensorCore involvement."""

    def kernel(x_hbm, o_hbm, sems):
        copies = []
        for c, (start, size) in enumerate(chunk_bounds):
            cp = pltpu.make_async_copy(
                x_hbm.at[pl.ds(start, size)],
                o_hbm.at[pl.ds(start, size)],
                sems.at[c],
            )
            cp.start()
            copies.append(cp)
        for cp in copies:
            cp.wait()

    return kernel


def flatten_pallas(x: jax.Array, position: int = 1, *, force_copy: bool = False) -> jax.Array:
    """Equivalent of torch.Tensor.flatten(position).

    By default this is the free metadata reshape (what torch does).  With
    force_copy=True the data movement is performed by a Pallas HBM->HBM DMA
    kernel (useful when a fresh buffer is explicitly wanted)."""
    if x.ndim == 0:
        # torch.flatten on a 0-d tensor yields shape (1,); no kernel needed.
        return jnp.reshape(x, (1,))

    if position < 0:
        position += x.ndim
    if position >= x.ndim - 1:
        # Flattening from the last axis onward is a shape no-op.
        return x

    out_shape = x.shape[:position] + (math.prod(x.shape[position:]),)
    nbytes = x.size * x.dtype.itemsize

    if x.size == 0 or (not force_copy and nbytes <= _SMALL_BYPASS_BYTES):
        # Pure metadata reshape: zero HBM traffic, zero launch overhead.
        return jnp.reshape(x, out_shape)

    # Free metadata reshape outside the kernel -> kernel copies identical layouts.
    x_flat = jnp.reshape(x, out_shape)

    chunks = _chunk_bounds(out_shape[0])
    kernel = _make_dma_copy_kernel(chunks)

    return pl.pallas_call(
        kernel,
        out_shape=jax.ShapeDtypeStruct(out_shape, x.dtype),
        in_specs=[pl.BlockSpec(memory_space=pl.ANY)],
        out_specs=pl.BlockSpec(memory_space=pl.ANY),
        scratch_shapes=[pltpu.SemaphoreType.DMA((len(chunks),))],
        cost_estimate=pl.CostEstimate(
            flops=0,
            transcendentals=0,
            bytes_accessed=2 * nbytes,
        ),
    )(x_flat)


class Flatten:
    """JAX/Pallas mirror of the PyTorch Flatten module."""

    def __init__(self, position: int = 1, force_copy: bool = False):
        self.position = position
        self.force_copy = force_copy

    def __call__(self, tensor: jax.Array) -> jax.Array:
        return flatten_pallas(tensor, self.position, force_copy=self.force_copy)


if __name__ == "__main__":
    key = jax.random.PRNGKey(0)
    # Small NCHW input consistent with how Flatten is used inside a conv VAE.
    x = jax.random.normal(key, (2, 4, 16, 16), dtype=jnp.float32)
    ref = jnp.reshape(x, (x.shape[0], -1))

    # 1) Force the Pallas HBM->HBM DMA kernel path (demo tensor is tiny, so the
    #    default path would otherwise take the metadata-reshape bypass).
    module = Flatten(position=1, force_copy=True)
    out = jax.block_until_ready(module(x))
    assert out.shape == (2, 4 * 16 * 16), out.shape
    assert out.dtype == x.dtype
    assert bool(jnp.array_equal(out, ref))

    # 2) Default path: small-tensor bypass (pure metadata reshape), same result.
    out_bypass = jax.block_until_ready(Flatten(position=1)(x))
    assert bool(jnp.array_equal(out_bypass, ref))

    # 3) Multi-chunk DMA path: leading axis large enough to split into 4 DMAs.
    x2 = jax.random.normal(jax.random.PRNGKey(1), (64, 8, 8), dtype=jnp.float32)
    out2 = jax.block_until_ready(flatten_pallas(x2, 1, force_copy=True))
    assert bool(jnp.array_equal(out2, jnp.reshape(x2, (64, 64))))

    # 4) No-op path: flattening from the last axis onward.
    out_noop = jax.block_until_ready(Flatten(position=-1)(x))
    assert out_noop.shape == x.shape

    print("KERNEL_OK")
</pallas_src>

<mosaic_0001>
module attributes {stable_mosaic.version = 11 : i64} {
  func.func @kernel(%arg0: memref<2x1024xf32, #tpu.memory_space<any>>, %arg1: memref<2x1024xf32, #tpu.memory_space<any>>, %arg2: memref<1x!tpu.dma_semaphore, #tpu.memory_space<semaphore_mem>>) attributes {dimension_semantics = [], scalar_prefetch = 0 : i64, scratch_operands = 1 : i64, tpu.core_type = #tpu.core_type<tc>} {
    %c0_i32 = arith.constant 0 : i32
    %c0_i32_0 = arith.constant 0 : i32
    %c0_i32_1 = arith.constant 0 : i32
    %0 = tpu.memref_slice %arg0[%c0_i32_0, %c0_i32_1] : memref<2x1024xf32, #tpu.memory_space<any>> -> memref<2x1024xf32, #tpu.memory_space<any>>
    %c0_i32_2 = arith.constant 0 : i32
    %c0_i32_3 = arith.constant 0 : i32
    %1 = tpu.memref_slice %arg1[%c0_i32_2, %c0_i32_3] : memref<2x1024xf32, #tpu.memory_space<any>> -> memref<2x1024xf32, #tpu.memory_space<any>>
    %2 = tpu.memref_slice %arg2[%c0_i32] : memref<1x!tpu.dma_semaphore, #tpu.memory_space<semaphore_mem>> -> memref<1x!tpu.dma_semaphore, #tpu.memory_space<semaphore_mem>>
    %3 = tpu.memref_squeeze %2 : memref<1x!tpu.dma_semaphore, #tpu.memory_space<semaphore_mem>> -> memref<!tpu.dma_semaphore, #tpu.memory_space<semaphore_mem>>
    tpu.enqueue_dma source(%0 : memref<2x1024xf32, #tpu.memory_space<any>>) target(%1 : memref<2x1024xf32, #tpu.memory_space<any>>) target_semaphore(%3 : memref<!tpu.dma_semaphore, #tpu.memory_space<semaphore_mem>>)
    %c0_i32_4 = arith.constant 0 : i32
    %c0_i32_5 = arith.constant 0 : i32
    %c0_i32_6 = arith.constant 0 : i32
    %4 = tpu.memref_slice %arg0[%c0_i32_5, %c0_i32_6] : memref<2x1024xf32, #tpu.memory_space<any>> -> memref<2x1024xf32, #tpu.memory_space<any>>
    %c0_i32_7 = arith.constant 0 : i32
    %c0_i32_8 = arith.constant 0 : i32
    %5 = tpu.memref_slice %arg1[%c0_i32_7, %c0_i32_8] : memref<2x1024xf32, #tpu.memory_space<any>> -> memref<2x1024xf32, #tpu.memory_space<any>>
    %6 = tpu.memref_slice %arg2[%c0_i32_4] : memref<1x!tpu.dma_semaphore, #tpu.memory_space<semaphore_mem>> -> memref<1x!tpu.dma_semaphore, #tpu.memory_space<semaphore_mem>>
    %7 = tpu.memref_squeeze %6 : memref<1x!tpu.dma_semaphore, #tpu.memory_space<semaphore_mem>> -> memref<!tpu.dma_semaphore, #tpu.memory_space<semaphore_mem>>
    tpu.wait_dma2 semaphore(%7 : memref<!tpu.dma_semaphore, #tpu.memory_space<semaphore_mem>>) src(%4 : memref<2x1024xf32, #tpu.memory_space<any>>) dst(%5 : memref<2x1024xf32, #tpu.memory_space<any>>)
    return
  }
}

</mosaic_0001>

<llo_original>
// kernel: tpu_custom_call.1
$region0: #{tpu_custom_call.1}
  #allocation0 [shape = 'u32[]', space=smem, size = 0x4, offset = 0x4, fixed_abs, tag = 'smem constant byte address 0x4 - core index']
  #allocation1 [shape = 'u32[144,128]{1,0:T(1,128)}', space=vmem, size = 0x12000, scoped, tag = 'internal scratch']
  #allocation2 [shape = 's32[1]{0}', space=sflag, size = 0x4, scoped, tag = 'scratch operand']
  #allocation3 [shape = 's32[]', space=sflag, size = 0x4, offset = 0, fixed_abs, tag = 'sflag constant byte address 0x0 - dummy sync flag']
  #allocation4 [shape = 'u32[0]{0}', space=smem, size = 0, offset = 0, fixed_abs, tag = 'smem constant byte address 0x0 - null']
  %s0 = inlined_call_operand.hbm [shape: f32[2,1024], index: 0, kind: input, shape index: {}]
  %s1 = inlined_call_operand.hbm [shape: f32[2,1024], index: 1, kind: output, shape index: {}]
  %s2 = sld [smem:[#allocation0]]
  $region2: #{tpu_custom_call.1} parent=0
    _
  %s4 = ssub.s32 1, %s2
  %s5 = scalar_select 0, %s4, %s2
  %s7 = sshll.u32 1, 14
  %s8 = sxor.u32 4294967295, %s7
  %s11 = sshll.u32 3, 24
  %s12 = sxor.u32 4294967295, %s11
  %s13 = sand.u32 0, %s12
  %s15 = sor.u32 %s13, 0
  %18 = dma.general %s0, 256, %s1, [#allocation2], [#allocation3], [#allocation4], %s15, 0
  %s19 = smul.u32 2, 1
  %s20 = smul.u32 %s19, 8
  %s21 = sshll.u32 %s20, 4
  %22 = dma.done [#allocation2], %s21
  %23 = vsyncmov [#allocation2]
  %s24 = vpop.sfrf %23
  %p25 = scmp.eq.s32.totalorder %s24, 0
  %p26 = pneg %p25
  %28 = shalt.err (%p26)

</llo_original>
